<compile_context>
chip_gen: v5e
topology: v5e:2x2
jax: 0.10.0
libtpu: 0.0.40
codegen_flags: <defaults>
</compile_context>

<pallas_src>
import jax
import jax.numpy as jnp
import numpy as np
from jax.experimental import pallas as pl
from jax.experimental.pallas import tpu as pltpu


def _round_up(x, m):
    return ((x + m - 1) // m) * m


def _mish_fast(x):
    # Mish(x) = x * tanh(softplus(x))
    # tanh(log(1+e^x)) = (e^{2x} + 2e^x) / (e^{2x} + 2e^x + 2)
    # -> 1 EUP exp + VPU adds/muls + 1 approx reciprocal (vs exp+log1p+tanh).
    e = jnp.exp(x)                        # single EUP push
    n = e * e + 2.0 * e                   # e^{2x} + 2 e^x
    t = n * pl.reciprocal(n + 2.0, approx=True)
    # e*e overflows f32 near x ~ 44; for x > 20, mish(x) == x to f32 precision.
    return jnp.where(x > 20.0, x, x * t)


def mlp_kernel(x_ref, w1_ref, b1_ref, w2_ref, b2_ref, w3_ref, b3_ref, o_ref):
    # bf16 cast done in-kernel (VPU cast hidden under the input DMA); avoids a
    # separate wrapper-side XLA cast that would re-read/re-write x in HBM.
    x = x_ref[...].astype(jnp.bfloat16)                                   # (TB, F)

    # hidden layer 1: Linear + ReLU   (bf16 MXU operands, f32 accumulation)
    h1 = jnp.dot(x, w1_ref[...], preferred_element_type=jnp.float32) + b1_ref[...]
    h1 = jnp.maximum(h1, 0.0)

    # hidden layer 2: Linear + Mish
    h2 = jnp.dot(h1.astype(jnp.bfloat16), w2_ref[...],
                 preferred_element_type=jnp.float32) + b2_ref[...]
    h2 = _mish_fast(h2)

    # output layer: Linear (logits, lane-dense padded to 128 columns)
    o_ref[...] = (
        jnp.dot(h2.astype(jnp.bfloat16), w3_ref[...],
                preferred_element_type=jnp.float32) + b3_ref[...]
    ).astype(o_ref.dtype)


def _choose_batch_tile(batch, tb):
    """Pick a batch tile that is a multiple of 8, divides round_up(batch, 8),
    is <= tb, and yields >= 2 grid steps whenever the batch allows (v7x: both
    TensorCores get work under dimension_semantics=("parallel",))."""
    b_pad = _round_up(batch, 8)
    cap = min(tb, b_pad)
    if b_pad >= 16:
        cap = min(cap, b_pad // 2)        # guarantee >= 2 tiles when possible
    cap = max(cap, 8)
    best = 8
    for d in range(8, cap + 1, 8):
        if b_pad % d == 0:
            best = d
    return b_pad, best


def species_classifier_forward(x, w1, b1, w2, b2, w3, b3, *, tb=2048,
                               out_dtype=jnp.bfloat16, return_padded=False):
    """x: (B, F); w*: (in, out) already transposed from PyTorch (out, in); b*: (1, out)."""
    batch, num_features = x.shape
    hidden = w1.shape[1]
    num_species = w3.shape[1]

    # --- lane-dense output: pad species dim to a multiple of 128 -------------
    s_pad = max(_round_up(num_species, 128), 128)
    w3p = jnp.zeros((hidden, s_pad), w3.dtype).at[:, :num_species].set(w3)
    b3p = jnp.zeros((1, s_pad), b3.dtype).at[:, :num_species].set(b3)

    # --- batch tiling ---------------------------------------------------------
    b_pad, b_tile = _choose_batch_tile(batch, tb)
    if b_pad != batch:
        # At most 7 rows (only when batch % 8 != 0); b_tile always divides b_pad,
        # so no tile-sized padding pass over x is ever needed.
        x = jnp.pad(x, ((0, b_pad - batch), (0, 0)))

    # --- bf16 MXU weights, f32 biases (one-time tiny casts on reused params) --
    w1b = w1.astype(jnp.bfloat16)
    w2b = w2.astype(jnp.bfloat16)
    w3b = w3p.astype(jnp.bfloat16)
    b1f = b1.astype(jnp.float32)
    b2f = b2.astype(jnp.float32)
    b3f = b3p.astype(jnp.float32)

    grid = (b_pad // b_tile,)

    def resident(shape):
        # constant index_map + single pipeline buffer: the block is DMA'd once
        # and stays resident in VMEM for the whole grid (half the VMEM of the
        # default double-buffered pipelining).
        return pl.BlockSpec(shape, lambda i: (0, 0), pipeline_mode=pl.Buffered(1))

    # --- VMEM budget ----------------------------------------------------------
    x_bytes = x.dtype.itemsize
    o_bytes = jnp.dtype(out_dtype).itemsize
    resident_bytes = ((w1b.size + w2b.size + w3b.size) * 2
                      + (b1f.size + b2f.size + b3f.size) * 4)
    # TODO(synk): when resident_bytes approaches the v7x 64 MiB VMEM budget
    # (H ~ 4K with F=H), fall back to streaming the hidden dim as an
    # "arbitrary" grid reduction axis instead of assuming full residency.
    stream_bytes = (2 * b_tile * num_features * x_bytes      # x tile, double-buffered
                    + 2 * b_tile * s_pad * o_bytes)           # out tile, double-buffered
    interm_bytes = 4 * b_tile * max(num_features, hidden, s_pad) * 4   # h1/h2 headroom
    vmem_limit = int(min(100 * 2**20,
                         max(32 * 2**20,
                             resident_bytes + stream_bytes + interm_bytes + (4 << 20))))

    flops = 2 * b_pad * (num_features * hidden + hidden * hidden + hidden * s_pad)
    bytes_accessed = (b_pad * num_features * x_bytes          # x read (once, in-kernel cast)
                      + resident_bytes                        # weights/biases read once
                      + b_pad * s_pad * o_bytes)              # logits write (bf16)

    out = pl.pallas_call(
        mlp_kernel,
        out_shape=jax.ShapeDtypeStruct((b_pad, s_pad), out_dtype),
        grid=grid,
        in_specs=[
            pl.BlockSpec((b_tile, num_features), lambda i: (i, 0)),   # x: tiled over batch
            resident((num_features, hidden)),                         # w1
            resident((1, hidden)),                                    # b1
            resident((hidden, hidden)),                               # w2
            resident((1, hidden)),                                    # b2
            resident((hidden, s_pad)),                                # w3 (padded)
            resident((1, s_pad)),                                     # b3 (padded)
        ],
        out_specs=pl.BlockSpec((b_tile, s_pad), lambda i: (i, 0)),
        compiler_params=pltpu.CompilerParams(
            dimension_semantics=("parallel",),                        # 2 TCs on v7x
            vmem_limit_bytes=vmem_limit,
        ),
        cost_estimate=pl.CostEstimate(
            flops=flops,
            transcendentals=b_pad * hidden,                           # one exp per h2 elem
            bytes_accessed=bytes_accessed,
        ),
    )(x, w1b, b1f, w2b, b2f, w3b, b3f)

    if return_padded:
        # (b_pad, s_pad) slab for consumers that slice lazily / fuse downstream.
        return out
    return out[:batch, :num_species]


def init_linear(key, fan_in, fan_out):
    """PyTorch nn.Linear default init: U(-1/sqrt(fan_in), 1/sqrt(fan_in)).
    Weight returned already transposed to (fan_in, fan_out); bias (1, fan_out)."""
    kw, kb = jax.random.split(key)
    bound = 1.0 / np.sqrt(fan_in)
    w = jax.random.uniform(kw, (fan_in, fan_out), jnp.float32, -bound, bound)
    b = jax.random.uniform(kb, (1, fan_out), jnp.float32, -bound, bound)
    return w, b


def reference_forward(x, w1, b1, w2, b2, w3, b3):
    # Mirrors the kernel's bf16-operand / f32-accumulation precision, but uses the
    # canonical Mish formula (x * tanh(softplus(x))) as the numerical reference.
    h1 = jnp.dot(x.astype(jnp.bfloat16), w1.astype(jnp.bfloat16),
                 preferred_element_type=jnp.float32) + b1
    h1 = jnp.maximum(h1, 0.0)
    h2 = jnp.dot(h1.astype(jnp.bfloat16), w2.astype(jnp.bfloat16),
                 preferred_element_type=jnp.float32) + b2
    h2 = h2 * jnp.tanh(jax.nn.softplus(h2))
    return jnp.dot(h2.astype(jnp.bfloat16), w3.astype(jnp.bfloat16),
                   preferred_element_type=jnp.float32) + b3


if __name__ == "__main__":
    # Small shapes consistent with the module (H = max(F, S))
    batch = 64
    num_features = 32
    num_species = 10
    hidden = max(num_features, num_species)  # 32

    key = jax.random.PRNGKey(0)
    kx, k1, k2, k3 = jax.random.split(key, 4)

    x = jax.random.normal(kx, (batch, num_features), jnp.float32)
    w1, b1 = init_linear(k1, num_features, hidden)
    w2, b2 = init_linear(k2, hidden, hidden)
    w3, b3 = init_linear(k3, hidden, num_species)

    # tb=16 -> 4 grid steps, exercises the pipelined batch tiling at small scale
    out = species_classifier_forward(x, w1, b1, w2, b2, w3, b3, tb=16)
    out = jax.block_until_ready(out)

    ref = reference_forward(x, w1, b1, w2, b2, w3, b3)
    # bf16 logits + fast-Mish approximation => slightly looser tolerance than f32
    np.testing.assert_allclose(np.asarray(out, dtype=np.float32), np.asarray(ref),
                               rtol=2e-2, atol=2e-2)

    print("KERNEL_OK")
</pallas_src>

<mosaic_0001>
module attributes {stable_mosaic.version = 11 : i64} {
  func.func @mlp_kernel(%arg0: i32, %arg1: memref<16x32xf32, #tpu.memory_space<vmem>>, %arg2: memref<32x32xbf16, #tpu.memory_space<vmem>>, %arg3: memref<1x32xf32, #tpu.memory_space<vmem>>, %arg4: memref<32x32xbf16, #tpu.memory_space<vmem>>, %arg5: memref<1x32xf32, #tpu.memory_space<vmem>>, %arg6: memref<32x128xbf16, #tpu.memory_space<vmem>>, %arg7: memref<1x128xf32, #tpu.memory_space<vmem>>, %arg8: memref<16x128xbf16, #tpu.memory_space<vmem>>) attributes {dimension_semantics = [#tpu.dimension_semantics<parallel>], iteration_bounds = array<i64: 4>, scalar_prefetch = 0 : i64, scratch_operands = 0 : i64, tpu.core_type = #tpu.core_type<tc>, window_params = [{transform_indices = @transform_0, window_bounds = array<i64: 16, 32>}, {pipeline_mode = #tpu.pipeline_mode<synchronous>, transform_indices = @transform_1, window_bounds = array<i64: 32, 32>}, {pipeline_mode = #tpu.pipeline_mode<synchronous>, transform_indices = @transform_2, window_bounds = array<i64: 1, 32>}, {pipeline_mode = #tpu.pipeline_mode<synchronous>, transform_indices = @transform_3, window_bounds = array<i64: 32, 32>}, {pipeline_mode = #tpu.pipeline_mode<synchronous>, transform_indices = @transform_4, window_bounds = array<i64: 1, 32>}, {pipeline_mode = #tpu.pipeline_mode<synchronous>, transform_indices = @transform_5, window_bounds = array<i64: 32, 128>}, {pipeline_mode = #tpu.pipeline_mode<synchronous>, transform_indices = @transform_6, window_bounds = array<i64: 1, 128>}, {transform_indices = @transform_7, window_bounds = array<i64: 16, 128>}]} {
    %c0 = arith.constant 0 : index
    %c0_0 = arith.constant 0 : index
    %0 = vector.load %arg1[%c0, %c0_0] : memref<16x32xf32, #tpu.memory_space<vmem>>, vector<16x32xf32>
    %1 = arith.truncf %0 : vector<16x32xf32> to vector<16x32xbf16>
    %c0_1 = arith.constant 0 : index
    %c0_2 = arith.constant 0 : index
    %2 = vector.load %arg2[%c0_1, %c0_2] : memref<32x32xbf16, #tpu.memory_space<vmem>>, vector<32x32xbf16>
    %cst = arith.constant dense<0.000000e+00> : vector<16x32xf32>
    %3 = tpu.matmul %1, %2, %cst {dimension_numbers = #tpu.dot_dimension_numbers<[1], [0], [0], [1], [0, 0, 1, 1], [], []>} : vector<16x32xbf16>, vector<32x32xbf16>, vector<16x32xf32> -> vector<16x32xf32>
    %c0_3 = arith.constant 0 : index
    %c0_4 = arith.constant 0 : index
    %4 = vector.load %arg3[%c0_3, %c0_4] : memref<1x32xf32, #tpu.memory_space<vmem>>, vector<1x32xf32>
    %5 = vector.broadcast %4 : vector<1x32xf32> to vector<16x32xf32>
    %6 = arith.addf %3, %5 : vector<16x32xf32>
    %cst_5 = arith.constant 0.000000e+00 : f32
    %7 = vector.broadcast %cst_5 : f32 to vector<16x32xf32>
    %8 = arith.maximumf %6, %7 : vector<16x32xf32>
    %9 = arith.truncf %8 : vector<16x32xf32> to vector<16x32xbf16>
    %c0_6 = arith.constant 0 : index
    %c0_7 = arith.constant 0 : index
    %10 = vector.load %arg4[%c0_6, %c0_7] : memref<32x32xbf16, #tpu.memory_space<vmem>>, vector<32x32xbf16>
    %cst_8 = arith.constant dense<0.000000e+00> : vector<16x32xf32>
    %11 = tpu.matmul %9, %10, %cst_8 {dimension_numbers = #tpu.dot_dimension_numbers<[1], [0], [0], [1], [0, 0, 1, 1], [], []>} : vector<16x32xbf16>, vector<32x32xbf16>, vector<16x32xf32> -> vector<16x32xf32>
    %c0_9 = arith.constant 0 : index
    %c0_10 = arith.constant 0 : index
    %12 = vector.load %arg5[%c0_9, %c0_10] : memref<1x32xf32, #tpu.memory_space<vmem>>, vector<1x32xf32>
    %13 = vector.broadcast %12 : vector<1x32xf32> to vector<16x32xf32>
    %14 = arith.addf %11, %13 : vector<16x32xf32>
    %15 = math.exp %14 : vector<16x32xf32>
    %16 = arith.mulf %15, %15 : vector<16x32xf32>
    %cst_11 = arith.constant 2.000000e+00 : f32
    %17 = vector.broadcast %cst_11 : f32 to vector<16x32xf32>
    %18 = arith.mulf %17, %15 : vector<16x32xf32>
    %19 = arith.addf %16, %18 : vector<16x32xf32>
    %cst_12 = arith.constant 2.000000e+00 : f32
    %20 = vector.broadcast %cst_12 : f32 to vector<16x32xf32>
    %21 = arith.addf %19, %20 : vector<16x32xf32>
    %22 = tpu.reciprocal %21 {approx = true} : vector<16x32xf32> -> vector<16x32xf32>
    %23 = arith.mulf %19, %22 : vector<16x32xf32>
    %cst_13 = arith.constant 2.000000e+01 : f32
    %24 = vector.broadcast %cst_13 : f32 to vector<16x32xf32>
    %25 = arith.cmpf ogt, %14, %24 : vector<16x32xf32>
    %26 = arith.mulf %14, %23 : vector<16x32xf32>
    %27 = arith.select %25, %14, %26 : vector<16x32xi1>, vector<16x32xf32>
    %28 = arith.truncf %27 : vector<16x32xf32> to vector<16x32xbf16>
    %c0_14 = arith.constant 0 : index
    %c0_15 = arith.constant 0 : index
    %29 = vector.load %arg6[%c0_14, %c0_15] : memref<32x128xbf16, #tpu.memory_space<vmem>>, vector<32x128xbf16>
    %cst_16 = arith.constant dense<0.000000e+00> : vector<16x128xf32>
    %30 = tpu.matmul %28, %29, %cst_16 {dimension_numbers = #tpu.dot_dimension_numbers<[1], [0], [0], [1], [0, 0, 1, 1], [], []>} : vector<16x32xbf16>, vector<32x128xbf16>, vector<16x128xf32> -> vector<16x128xf32>
    %c0_17 = arith.constant 0 : index
    %c0_18 = arith.constant 0 : index
    %31 = vector.load %arg7[%c0_17, %c0_18] : memref<1x128xf32, #tpu.memory_space<vmem>>, vector<1x128xf32>
    %32 = vector.broadcast %31 : vector<1x128xf32> to vector<16x128xf32>
    %33 = arith.addf %30, %32 : vector<16x128xf32>
    %34 = arith.truncf %33 : vector<16x128xf32> to vector<16x128xbf16>
    %c0_19 = arith.constant 0 : index
    %c0_20 = arith.constant 0 : index
    %35 = vector.load %arg8[%c0_19, %c0_20] : memref<16x128xbf16, #tpu.memory_space<vmem>>, vector<16x128xbf16>
    tpu.vector_store %arg8[%c0_19, %c0_20], %34 {strides = array<i32>} : memref<16x128xbf16, #tpu.memory_space<vmem>>, vector<16x128xbf16>,
    return
  }
  func.func @transform_0(%arg0: i32) -> (i32, i32) {
    %c0_i32 = arith.constant 0 : i32
    %c0_i32_0 = arith.constant 0 : i32
    return %arg0, %c0_i32 : i32, i32
  }
  func.func @transform_1(%arg0: i32) -> (i32, i32) {
    %c0_i32 = arith.constant 0 : i32
    %c0_i32_0 = arith.constant 0 : i32
    %c0_i32_1 = arith.constant 0 : i32
    return %c0_i32, %c0_i32_0 : i32, i32
  }
  func.func @transform_2(%arg0: i32) -> (i32, i32) {
    %c0_i32 = arith.constant 0 : i32
    %c0_i32_0 = arith.constant 0 : i32
    %c0_i32_1 = arith.constant 0 : i32
    return %c0_i32, %c0_i32_0 : i32, i32
  }
  func.func @transform_3(%arg0: i32) -> (i32, i32) {
    %c0_i32 = arith.constant 0 : i32
    %c0_i32_0 = arith.constant 0 : i32
    %c0_i32_1 = arith.constant 0 : i32
    return %c0_i32, %c0_i32_0 : i32, i32
  }
  func.func @transform_4(%arg0: i32) -> (i32, i32) {
    %c0_i32 = arith.constant 0 : i32
    %c0_i32_0 = arith.constant 0 : i32
    %c0_i32_1 = arith.constant 0 : i32
    return %c0_i32, %c0_i32_0 : i32, i32
  }
  func.func @transform_5(%arg0: i32) -> (i32, i32) {
    %c0_i32 = arith.constant 0 : i32
    %c0_i32_0 = arith.constant 0 : i32
    %c0_i32_1 = arith.constant 0 : i32
    return %c0_i32, %c0_i32_0 : i32, i32
  }
  func.func @transform_6(%arg0: i32) -> (i32, i32) {
    %c0_i32 = arith.constant 0 : i32
    %c0_i32_0 = arith.constant 0 : i32
    %c0_i32_1 = arith.constant 0 : i32
    return %c0_i32, %c0_i32_0 : i32, i32
  }
  func.func @transform_7(%arg0: i32) -> (i32, i32) {
    %c0_i32 = arith.constant 0 : i32
    %c0_i32_0 = arith.constant 0 : i32
    return %arg0, %c0_i32 : i32, i32
  }
}

</mosaic_0001>

<llo_original>
// kernel: tpu_custom_call.1
$region0: #{tpu_custom_call.1}
  #allocation0 [shape = 'u32[]', space=smem, size = 0x4, offset = 0x4, fixed_abs, tag = 'smem constant byte address 0x4 - core index']
  #allocation1 [shape = 'u32[72,128]{1,0:T(1,128)}', space=vmem, size = 0x9000, scoped, tag = 'internal scratch']
  %s0 = inlined_call_operand.vmem [shape: f32[64,32], index: 0, kind: input, shape index: {}]
  %s1 = inlined_call_operand.vmem [shape: bf16[32,32], index: 1, kind: input, shape index: {}]
  %s2 = inlined_call_operand.vmem [shape: f32[1,32], index: 2, kind: input, shape index: {}]
  %s3 = inlined_call_operand.vmem [shape: bf16[32,32], index: 3, kind: input, shape index: {}]
  %s4 = inlined_call_operand.vmem [shape: f32[1,32], index: 4, kind: input, shape index: {}]
  %s5 = inlined_call_operand.vmem [shape: bf16[32,128], index: 5, kind: input, shape index: {}]
  %s6 = inlined_call_operand.vmem [shape: f32[1,128], index: 6, kind: input, shape index: {}]
  %s7 = inlined_call_operand.hbm [shape: bf16[64,128], index: 7, kind: output, shape index: {}]
  %s8 = sld [smem:[#allocation0]]
  $region61: #{tpu_custom_call.1} parent=0
    _
  %s10 = ssub.s32 1, %s8
  %s11 = scalar_select 0, %s10, %s8
  $region1: #{tpu_custom_call.1} parent=0
    #allocation2 [shape = 'u8[8192]{0}', space=vmem, size = 0x2000, scoped, tag = 'output window, operand 0']
    #allocation3 [shape = 's32[2]{0}', space=sflag, size = 0x8, scoped, tag = 'scoped memory for tpu_custom_call.1']
    %12 = vsyncpa [#allocation3], 0
    %s13 = scalar_lea.sflag [#allocation3], 1
    %14 = vsyncpa %s13, 0
    loop: start=0, step=1, limit=6
    $region2: #{tpu_custom_call.1} parent=1 // loop_pre_header
      _
    $region3: #{tpu_custom_call.1} parent=1 // loop_header
      %s16 = sphi 0, %s20
      %p17 = scmp.ge.s32.totalorder %s16, 6
      %s26 = sphi 0, %s28
      %s29 = sphi 0, %s26
      %s30 = sphi 0, %s29
      %s46 = sphi 0, %s30
      %s50 = sphi 0, %s50
      %s52 = sphi 0, %s50
      %s53 = sphi 0, %s52
      %s67 = sphi 0, %s53
      %s71 = sphi 0, %s71
      %s73 = sphi 0, %s71
      %s74 = sphi 0, %s73
      %s88 = sphi 0, %s74
      %s92 = sphi 0, %s92
      %s94 = sphi 0, %s92
      %s95 = sphi 0, %s94
      %s109 = sphi 0, %s95
      %s113 = sphi 0, %s113
      %s115 = sphi 0, %s113
      %s116 = sphi 0, %s115
      %s130 = sphi 0, %s116
      %s134 = sphi 0, %s134
      %s136 = sphi 0, %s134
      %s137 = sphi 0, %s136
      %s151 = sphi 0, %s137
      %s155 = sphi 0, %s155
      %s157 = sphi 0, %s155
      %s158 = sphi 0, %s157
      %s172 = sphi 0, %s158
      %s178 = sphi 0, %s180
      %s181 = sphi 0, %s178
      %s182 = sphi 0, %s181
      %s198 = sphi 0, %s182
    $region4: #{tpu_custom_call.1} parent=1 // loop_header_branch
      %19 = sbr.rel (%p17) target = $region8
    $region5: #{tpu_custom_call.1} parent=1 // loop_body
      %s21 = ssub.s32 %s16, 1
      %s22 = ssub.s32 %s16, 2
      %s23 = sadd.s32 %s16, 1
      %s24 = ssub.s32 %s16, %s23
      %p25 = scmp.eq.s32.totalorder %s24, 0
      %s27 = sadd.s32 %s26, 1
      %s28 = scalar_select %p25, %s26, %s27
      %p31 = pneg %p25
      %p32 = scmp.eq.s32.totalorder %s16, 3
      %p33 = por %p31, %p32
      %p34 = scmp.ne.s32.totalorder %s26, %s29
      %p35 = scmp.eq.s32.totalorder %s16, 0
      %p36 = por %p34, %p35
      %p37 = scmp.ne.s32.totalorder %s26, %s29
      %p38 = scmp.eq.s32.totalorder %s21, 3
      %p39 = por %p37, %p38
      %p40 = scmp.ne.s32.totalorder %s29, %s30
      %p41 = scmp.eq.s32.totalorder %s21, 0
      %p42 = por %p40, %p41
      %p43 = scmp.ne.s32.totalorder %s29, %s30
      %p44 = scmp.eq.s32.totalorder %s22, 3
      %p45 = por %p43, %p44
      %p47 = scmp.ne.s32.totalorder %s30, %s46
      %p48 = scmp.eq.s32.totalorder %s22, 0
      %p49 = por %p47, %p48
      %s51 = sadd.s32 %s50, 1
      %p54 = scmp.eq.s32.totalorder %s16, 3
      %p55 = scmp.ne.s32.totalorder %s50, %s52
      %p56 = scmp.eq.s32.totalorder %s16, 0
      %p57 = por %p55, %p56
      %p58 = scmp.ne.s32.totalorder %s50, %s52
      %p59 = scmp.eq.s32.totalorder %s21, 3
      %p60 = por %p58, %p59
      %p61 = scmp.ne.s32.totalorder %s52, %s53
      %p62 = scmp.eq.s32.totalorder %s21, 0
      %p63 = por %p61, %p62
      %p64 = scmp.ne.s32.totalorder %s52, %s53
      %p65 = scmp.eq.s32.totalorder %s22, 3
      %p66 = por %p64, %p65
      %p68 = scmp.ne.s32.totalorder %s53, %s67
      %p69 = scmp.eq.s32.totalorder %s22, 0
      %p70 = por %p68, %p69
      %s72 = sadd.s32 %s71, 1
      %p75 = scmp.eq.s32.totalorder %s16, 3
      %p76 = scmp.ne.s32.totalorder %s71, %s73
      %p77 = scmp.eq.s32.totalorder %s16, 0
      %p78 = por %p76, %p77
      %p79 = scmp.ne.s32.totalorder %s71, %s73
      %p80 = scmp.eq.s32.totalorder %s21, 3
      %p81 = por %p79, %p80
      %p82 = scmp.ne.s32.totalorder %s73, %s74
      %p83 = scmp.eq.s32.totalorder %s21, 0
      %p84 = por %p82, %p83
      %p85 = scmp.ne.s32.totalorder %s73, %s74
      %p86 = scmp.eq.s32.totalorder %s22, 3
      %p87 = por %p85, %p86
      %p89 = scmp.ne.s32.totalorder %s74, %s88
      %p90 = scmp.eq.s32.totalorder %s22, 0
      %p91 = por %p89, %p90
      %s93 = sadd.s32 %s92, 1
      %p96 = scmp.eq.s32.totalorder %s16, 3
      %p97 = scmp.ne.s32.totalorder %s92, %s94
      %p98 = scmp.eq.s32.totalorder %s16, 0
      %p99 = por %p97, %p98
      %p100 = scmp.ne.s32.totalorder %s92, %s94
      %p101 = scmp.eq.s32.totalorder %s21, 3
      %p102 = por %p100, %p101
      %p103 = scmp.ne.s32.totalorder %s94, %s95
      %p104 = scmp.eq.s32.totalorder %s21, 0
      %p105 = por %p103, %p104
      %p106 = scmp.ne.s32.totalorder %s94, %s95
      %p107 = scmp.eq.s32.totalorder %s22, 3
      %p108 = por %p106, %p107
      %p110 = scmp.ne.s32.totalorder %s95, %s109
      %p111 = scmp.eq.s32.totalorder %s22, 0
      %p112 = por %p110, %p111
      %s114 = sadd.s32 %s113, 1
      %p117 = scmp.eq.s32.totalorder %s16, 3
      %p118 = scmp.ne.s32.totalorder %s113, %s115
      %p119 = scmp.eq.s32.totalorder %s16, 0
      %p120 = por %p118, %p119
      %p121 = scmp.ne.s32.totalorder %s113, %s115
      %p122 = scmp.eq.s32.totalorder %s21, 3
      %p123 = por %p121, %p122
      %p124 = scmp.ne.s32.totalorder %s115, %s116
      %p125 = scmp.eq.s32.totalorder %s21, 0
      %p126 = por %p124, %p125
      %p127 = scmp.ne.s32.totalorder %s115, %s116
      %p128 = scmp.eq.s32.totalorder %s22, 3
      %p129 = por %p127, %p128
      %p131 = scmp.ne.s32.totalorder %s116, %s130
      %p132 = scmp.eq.s32.totalorder %s22, 0
      %p133 = por %p131, %p132
      %s135 = sadd.s32 %s134, 1
      %p138 = scmp.eq.s32.totalorder %s16, 3
      %p139 = scmp.ne.s32.totalorder %s134, %s136
      %p140 = scmp.eq.s32.totalorder %s16, 0
      %p141 = por %p139, %p140
      %p142 = scmp.ne.s32.totalorder %s134, %s136
      %p143 = scmp.eq.s32.totalorder %s21, 3
      %p144 = por %p142, %p143
      %p145 = scmp.ne.s32.totalorder %s136, %s137
      %p146 = scmp.eq.s32.totalorder %s21, 0
      %p147 = por %p145, %p146
      %p148 = scmp.ne.s32.totalorder %s136, %s137
      %p149 = scmp.eq.s32.totalorder %s22, 3
      %p150 = por %p148, %p149
      %p152 = scmp.ne.s32.totalorder %s137, %s151
      %p153 = scmp.eq.s32.totalorder %s22, 0
      %p154 = por %p152, %p153
      %s156 = sadd.s32 %s155, 1
      %p159 = scmp.eq.s32.totalorder %s16, 3
      %p160 = scmp.ne.s32.totalorder %s155, %s157
      %p161 = scmp.eq.s32.totalorder %s16, 0
      %p162 = por %p160, %p161
      %p163 = scmp.ne.s32.totalorder %s155, %s157
      %p164 = scmp.eq.s32.totalorder %s21, 3
      %p165 = por %p163, %p164
      %p166 = scmp.ne.s32.totalorder %s157, %s158
      %p167 = scmp.eq.s32.totalorder %s21, 0
      %p168 = por %p166, %p167
      %p169 = scmp.ne.s32.totalorder %s157, %s158
      %p170 = scmp.eq.s32.totalorder %s22, 3
      %p171 = por %p169, %p170
      %p173 = scmp.ne.s32.totalorder %s158, %s172
      %p174 = scmp.eq.s32.totalorder %s22, 0
      %p175 = por %p173, %p174
      %s176 = ssub.s32 %s16, %s23
      %p177 = scmp.eq.s32.totalorder %s176, 0
      %s179 = sadd.s32 %s178, 1
      %s180 = scalar_select %p177, %s178, %s179
      %p183 = pneg %p177
      %p184 = scmp.eq.s32.totalorder %s16, 3
      %p185 = por %p183, %p184
      %p186 = scmp.ne.s32.totalorder %s178, %s181
      %p187 = scmp.eq.s32.totalorder %s16, 0
      %p188 = por %p186, %p187
      %p189 = scmp.ne.s32.totalorder %s178, %s181
      %p190 = scmp.eq.s32.totalorder %s21, 3
      %p191 = por %p189, %p190
      %p192 = scmp.ne.s32.totalorder %s181, %s182
      %p193 = scmp.eq.s32.totalorder %s21, 0
      %p194 = por %p192, %p193
      %p195 = scmp.ne.s32.totalorder %s181, %s182
      %p196 = scmp.eq.s32.totalorder %s22, 3
      %p197 = por %p195, %p196
      %p199 = scmp.ne.s32.totalorder %s182, %s198
      %p200 = scmp.eq.s32.totalorder %s22, 0
      %p201 = por %p199, %p200
      %p202 = scmp.le.s32.totalorder 1, %s16
      %p203 = scmp.lt.s32.totalorder %s16, 5
      %p204 = pnand %p202, %p203
      %p205 = pneg %p204
      // Predicated region
      $region9: #{tpu_custom_call.1} parent=5 // pred_check
        _
      $region10: #{tpu_custom_call.1} parent=5 // pred_check_branch
        %207 = sbr.rel (%p204) target = $region12
      $region11: #{tpu_custom_call.1} parent=5 // pred_region
        %s208 = ssub.s32 %s16, 1
        // Predicated region
        $region13: #{tpu_custom_call.1} parent=11 // pred_check
          %p209 = pneg %p63
        $region14: #{tpu_custom_call.1} parent=11 // pred_check_branch
          %211 = sbr.rel (%p209) target = $region16
        $region15: #{tpu_custom_call.1} parent=11 // pred_region
          _
        $region16: #{tpu_custom_call.1} parent=11 // pred_fallthru
          _
        // Predicated region
        $region17: #{tpu_custom_call.1} parent=11 // pred_check
          %p212 = pneg %p84
        $region18: #{tpu_custom_call.1} parent=11 // pred_check_branch
          %214 = sbr.rel (%p212) target = $region20
        $region19: #{tpu_custom_call.1} parent=11 // pred_region
          _
        $region20: #{tpu_custom_call.1} parent=11 // pred_fallthru
          _
        // Predicated region
        $region21: #{tpu_custom_call.1} parent=11 // pred_check
          %p215 = pneg %p105
        $region22: #{tpu_custom_call.1} parent=11 // pred_check_branch
          %217 = sbr.rel (%p215) target = $region24
        $region23: #{tpu_custom_call.1} parent=11 // pred_region
          _
        $region24: #{tpu_custom_call.1} parent=11 // pred_fallthru
          _
        // Predicated region
        $region25: #{tpu_custom_call.1} parent=11 // pred_check
          %p218 = pneg %p126
        $region26: #{tpu_custom_call.1} parent=11 // pred_check_branch
          %220 = sbr.rel (%p218) target = $region28
        $region27: #{tpu_custom_call.1} parent=11 // pred_region
          _
        $region28: #{tpu_custom_call.1} parent=11 // pred_fallthru
          _
        // Predicated region
        $region29: #{tpu_custom_call.1} parent=11 // pred_check
          %p221 = pneg %p147
        $region30: #{tpu_custom_call.1} parent=11 // pred_check_branch
          %223 = sbr.rel (%p221) target = $region32
        $region31: #{tpu_custom_call.1} parent=11 // pred_region
          _
        $region32: #{tpu_custom_call.1} parent=11 // pred_fallthru
          _
        // Predicated region
        $region33: #{tpu_custom_call.1} parent=11 // pred_check
          %p224 = pneg %p168
        $region34: #{tpu_custom_call.1} parent=11 // pred_check_branch
          %226 = sbr.rel (%p224) target = $region36
        $region35: #{tpu_custom_call.1} parent=11 // pred_region
          _
        $region36: #{tpu_custom_call.1} parent=11 // pred_fallthru
          _
      $region12: #{tpu_custom_call.1} parent=5 // pred_fallthru
        _
      %p227 = scmp.lt.s32.totalorder %s16, 4
      // Predicated region
      $region37: #{tpu_custom_call.1} parent=5 // pred_check
        %p228 = pneg %p227
      $region38: #{tpu_custom_call.1} parent=5 // pred_check_branch
        %230 = sbr.rel (%p228) target = $region40
      $region39: #{tpu_custom_call.1} parent=5 // pred_region
        // Predicated region
        $region41: #{tpu_custom_call.1} parent=39 // pred_check
          %p231 = pneg %p36
        $region42: #{tpu_custom_call.1} parent=39 // pred_check_branch
          %233 = sbr.rel (%p231) target = $region44
        $region43: #{tpu_custom_call.1} parent=39 // pred_region
          %s234 = smul.u32 2, %s16
          %p235 = scmp.lt.s32.totalorder %s234, 7
          %s236 = scalar_select %p235, %s234, 7
          %s237 = smul.addr %s236, 8
          %s238 = scalar_lea.vmem %s0, %s237
          %s239 = smul.u32 2, %s16
        $region44: #{tpu_custom_call.1} parent=39 // pred_fallthru
          _
      $region40: #{tpu_custom_call.1} parent=5 // pred_fallthru
        _
      %p240 = scmp.le.s32.totalorder 1, %s16
      %p241 = scmp.lt.s32.totalorder %s16, 5
      %p242 = pnand %p240, %p241
      %p243 = pneg %p242
      // Predicated region
      $region45: #{tpu_custom_call.1} parent=5 // pred_check
        _
      $region46: #{tpu_custom_call.1} parent=5 // pred_check_branch
        %245 = sbr.rel (%p242) target = $region48
      $region47: #{tpu_custom_call.1} parent=5 // pred_region
        %s246 = ssub.s32 %s16, 1
        %s247 = smul.u32 2, %s21
        %p248 = scmp.lt.s32.totalorder %s247, 7
        %s249 = scalar_select %p248, %s247, 7
        %s250 = smul.addr %s249, 8
        %s251 = scalar_lea.vmem %s0, %s250
        %p252 = pneg %p42
        %p253 = pneg %p39
        %p254 = pneg %p63
        %p255 = pneg %p60
        %p256 = pneg %p84
        %p257 = pneg %p81
        %p258 = pneg %p105
        %p259 = pneg %p102
        %p260 = pneg %p126
        %p261 = pneg %p123
        %p262 = pneg %p147
        %p263 = pneg %p144
        %p264 = pneg %p168
        %p265 = pneg %p165
        %p266 = pneg %p194
        %p267 = pneg %p191
        %s268 = sand.u32 %s181, 1
        %s269 = scalar_lea.sflag [#allocation3], %s268
        %s270 = sand.u32 %s181, 1
        %s271 = smul.addr %s270, 8
        %s272 = scalar_lea.vmem [#allocation2], %s271
        %s273 = smul.u32 2, %s21
        %p274 = scmp.lt.s32.totalorder %s273, 7
        %s275 = scalar_select %p274, %s273, 7
        %s276 = smul.addr %s275, 8
        %s277 = scalar_lea.vmem %s0, %s276
        %s278 = smul.u32 2, %s21
        %s279 = smul.u32 2, %s21
        %v281 = vld [vmem:[%s277] sm:$0xff]
        %v282 = vld [vmem:[%s277 + $0x8] sm:$0xff]
        %v283 = vpack.c.bf16 %v282, %v281
        %v284 = vld [vmem:[%s1] sm:$0xf]
        %v285 = vld [vmem:[%s1 + $0x4] sm:$0xf]
        %v286 = vld [vmem:[%s1 + $0x8] sm:$0xf]
        %v287 = vld [vmem:[%s1 + $0xc] sm:$0xf]
        %v288 = vld [vmem:[%s2] sm:$0x1]
        %v290 = vperm.slane %v288, 0
        %v296 = vunpack.c.l.b16 %v284
        %v297 = vunpack.c.l.b16 %v285
        %v298 = vunpack.c.l.b16 %v286
        %v299 = vunpack.c.l.b16 %v287
        %v300 = vpack.c.b16 %v297, %v296
        %v301 = vpack.c.b16 %v299, %v298
        %vm304 = vcmask 261120
        %v306 = vsel %vm304, %v283, 0
        %308 = vmatpush.bf16.msra.mxu0 0
        %309 = vmatpush.bf16.msra.mxu0 0
        %310 = vmatpush.bf16.msra.mxu0 0
        %311 = vmatpush.bf16.msra.mxu0 0
        %312 = vmatpush.bf16.msra.mxu0 0
        %313 = vmatpush.bf16.msra.mxu0 0
        %314 = vmatpush.bf16.msra.mxu0 %v301
        %315 = vmatpush.bf16.msra.mxu0 %v300
        %316 = vmatmul.bf16.gmra.mxu0 %v306
        %v317 = vpop.f32.mrf.mxu0
        %v318 = vadd.f32 %v290, %v317
        %v319 = vpop.f32.mrf.mxu0
        %v320 = vadd.f32 %v290, %v319
        %321 = vdwg.mxu0
        %v322 = vmax.f32 %v318, 0.0
        %v323 = vmax.f32 %v320, 0.0
        %v324 = vpack.c.bf16 %v323, %v322
        %v325 = vld [vmem:[%s3] sm:$0xf]
        %v326 = vld [vmem:[%s3 + $0x4] sm:$0xf]
        %v327 = vld [vmem:[%s3 + $0x8] sm:$0xf]
        %v328 = vld [vmem:[%s3 + $0xc] sm:$0xf]
        %v329 = vld [vmem:[%s4] sm:$0x1]
        %v331 = vperm.slane %v329, 0
        %v337 = vunpack.c.l.b16 %v325
        %v338 = vunpack.c.l.b16 %v326
        %v339 = vunpack.c.l.b16 %v327
        %v340 = vunpack.c.l.b16 %v328
        %v341 = vpack.c.b16 %v338, %v337
        %v342 = vpack.c.b16 %v340, %v339
        %v346 = vsel %vm304, %v324, 0
        %348 = vmatpush.bf16.msra.mxu0 0
        %349 = vmatpush.bf16.msra.mxu0 0
        %350 = vmatpush.bf16.msra.mxu0 0
        %351 = vmatpush.bf16.msra.mxu0 0
        %352 = vmatpush.bf16.msra.mxu0 0
        %353 = vmatpush.bf16.msra.mxu0 0
        %354 = vmatpush.bf16.msra.mxu0 %v342
        %355 = vmatpush.bf16.msra.mxu0 %v341
        %356 = vmatmul.bf16.gmra.mxu0 %v346
        %v357 = vpop.f32.mrf.mxu0
        %v358 = vadd.f32 %v331, %v357
        %v359 = vpop.f32.mrf.mxu0
        %v360 = vadd.f32 %v331, %v359
        %361 = vdwg.mxu0
        %v362 = vmul.f32 %v358, 1.442695
        %v363 = vpow.pop %v362
        %v364 = vmul.f32 %v360, 1.442695
        %v365 = vpow.pop %v364
        %v366 = vmul.f32 %v363, %v363
        %v367 = vmul.f32 %v365, %v365
        %v368 = vmul.f32 %v363, 2.0
        %v369 = vmul.f32 %v365, 2.0
        %v370 = vadd.f32 %v366, %v368
        %v371 = vadd.f32 %v367, %v369
        %v372 = vadd.f32 %v370, 2.0
        %v373 = vadd.f32 %v371, 2.0
        %v374 = vrcp.pop %v372
        %v375 = vrcp.pop %v373
        %v376 = vmul.f32 %v370, %v374
        %v377 = vmul.f32 %v371, %v375
        %vm378 = vcmp.gt.f32.partialorder %v358, 20.0
        %vm379 = vcmp.gt.f32.partialorder %v360, 20.0
        %v380 = vmul.f32 %v358, %v376
        %v381 = vmul.f32 %v360, %v377
        %v382 = vsel %vm378, %v358, %v380
        %v383 = vsel %vm379, %v360, %v381
        %v384 = vpack.c.bf16 %v383, %v382
        %v385 = vld [vmem:[%s5] sm:$0xf]
        %v386 = vld [vmem:[%s5 + $0x4] sm:$0xf]
        %v387 = vld [vmem:[%s5 + $0x8] sm:$0xf]
        %v388 = vld [vmem:[%s5 + $0xc] sm:$0xf]
        %v389 = vld [vmem:[%s6] sm:$0x1]
        %v391 = vperm.slane %v389, 0
        %v397 = vunpack.c.l.b16 %v385
        %v398 = vunpack.c.l.b16 %v386
        %v399 = vunpack.c.l.b16 %v387
        %v400 = vunpack.c.l.b16 %v388
        %v401 = vpack.c.b16 %v398, %v397
        %v402 = vpack.c.b16 %v400, %v399
        %v406 = vsel %vm304, %v384, 0
        %408 = vmatpush.bf16.msra.mxu0 0
        %409 = vmatpush.bf16.msra.mxu0 0
        %410 = vmatpush.bf16.msra.mxu0 0
        %411 = vmatpush.bf16.msra.mxu0 0
        %412 = vmatpush.bf16.msra.mxu0 0
        %413 = vmatpush.bf16.msra.mxu0 0
        %414 = vmatpush.bf16.msra.mxu0 %v402
        %415 = vmatpush.bf16.msra.mxu0 %v401
        %416 = vmatmul.bf16.gmra.mxu0 %v406
        %v417 = vpop.f32.mrf.mxu0
        %v418 = vadd.f32 %v391, %v417
        %v419 = vpop.f32.mrf.mxu0
        %v420 = vadd.f32 %v391, %v419
        %421 = vdwg.mxu0
        %v422 = vpack.c.bf16 %v418, %v418
        %v423 = vpack.c.bf16 %v420, %v420
        %424 = vst [vmem:[%s272] sm:$0xf] %v422
        %425 = vst [vmem:[%s272 + $0x4] sm:$0xf] %v423
        %s426 = sand.u32 %s181, 1
        %s427 = scalar_lea.sflag [#allocation3], %s426
        %s428 = sand.u32 %s181, 1
        %s429 = smul.addr %s428, 8
        %s430 = scalar_lea.vmem [#allocation2], %s429
        // Predicated region
        $region49: #{tpu_custom_call.1} parent=47 // pred_check
          %p431 = pneg %p191
        $region50: #{tpu_custom_call.1} parent=47 // pred_check_branch
          %433 = sbr.rel (%p431) target = $region52
        $region51: #{tpu_custom_call.1} parent=47 // pred_region
          %s434 = smul.u32 2, %s21
          %436 = vsyncadd %s427, 0
          %s437 = smul.addr %s434, 4
          %s438 = scalar_lea.hbm %s7, %s437
          %s439 = sshll.u32 %s430, 4
          %s440 = int_to_ptr.vmem [resolvable:$true] %s439
          %s441 = sshll.u32 %s438, 4
          %s442 = int_to_ptr.hbm [resolvable:$true] %s441
          %447 = dma.vmem_to_hbm [thread:$0]  %s440, 128, %s442, %s427, 64, 64, 4
        $region52: #{tpu_custom_call.1} parent=47 // pred_fallthru
          _
      $region48: #{tpu_custom_call.1} parent=5 // pred_fallthru
        _
      %p448 = scmp.le.s32.totalorder 2, %s16
      // Predicated region
      $region53: #{tpu_custom_call.1} parent=5 // pred_check
        %p449 = pneg %p448
      $region54: #{tpu_custom_call.1} parent=5 // pred_check_branch
        %451 = sbr.rel (%p449) target = $region56
      $region55: #{tpu_custom_call.1} parent=5 // pred_region
        %s452 = ssub.s32 %s16, 2
        // Predicated region
        $region57: #{tpu_custom_call.1} parent=55 // pred_check
          %p453 = pneg %p197
        $region58: #{tpu_custom_call.1} parent=55 // pred_check_branch
          %455 = sbr.rel (%p453) target = $region60
        $region59: #{tpu_custom_call.1} parent=55 // pred_region
          %s456 = sand.u32 %s182, 1
          %s457 = scalar_lea.sflag [#allocation3], %s456
          %s458 = sand.u32 %s182, 1
          %s459 = smul.addr %s458, 8
          %s460 = scalar_lea.vmem [#allocation2], %s459
          %462 = dma.done %s457, 128
        $region60: #{tpu_custom_call.1} parent=55 // pred_fallthru
          _
      $region56: #{tpu_custom_call.1} parent=5 // pred_fallthru
        _
    $region6: #{tpu_custom_call.1} parent=1 // loop_footer
      %s20 = sadd.s32 1, %s16
    $region7: #{tpu_custom_call.1} parent=1 // loop_footer_branch
      %15 = sbr.rel target = $region3
    $region8: #{tpu_custom_call.1} parent=1 // loop_exit
      _
    %463 = vsyncpa [#allocation3], 1
    %s464 = scalar_lea.sflag [#allocation3], 1
    %465 = vsyncpa %s464, 1

</llo_original>
